<compile_context>
chip_gen: v5e
topology: v5e:2x2
jax: 0.10.0
libtpu: 0.0.40
codegen_flags: <defaults>
</compile_context>

<pallas_src>
import functools

import jax
import jax.numpy as jnp
from jax.experimental import pallas as pl
from jax.experimental.pallas import tpu as pltpu


def _round_up(x, m):
    return (x + m - 1) // m * m


# ------------------------- pltpu.roll convention probe ------------------------

@functools.lru_cache(maxsize=None)
def _roll_matches_jnp() -> bool:
    """True iff pltpu.roll(x, s, ax) == jnp.roll(x, s, ax), i.e. out[j] = x[(j-s) % n]."""
    def probe(x_ref, o_ref):
        o_ref[...] = pltpu.roll(x_ref[...], 1, 1)

    try:
        x = jax.lax.broadcasted_iota(jnp.float32, (8, 128), 1)
        y = pl.pallas_call(
            probe, out_shape=jax.ShapeDtypeStruct((8, 128), jnp.float32))(x)
        return bool(jax.device_get(y)[0, 0] == 127.0)
    except Exception:   # conservative default (jnp.roll convention)
        return True


# ------------------------- Pallas kernel --------------------------------------

def _rnd_kernel(s_ref, halo_ref, meta_ref,
                w1a_ref, w1b_ref, b1_ref, w2_ref, b2_ref, w3_ref, b3_ref,
                out_ref, *, emb_dim, tile_n, roll_shift):
    """Fused learned+fixed 3-layer MLP on a feature-major tile.

    s_ref:    [obs, tile_n]  states (features on sublanes, transitions on lanes)
    halo_ref: [obs, 128]     first 128 columns of the NEXT tile
    meta_ref: [1, 2, tile_n] row 0 = dones, row 1 = (t == T-1) mask   (f32)
    w1a/w1b: [2H, obs]   b1: [2H, 1]     (learned | fixed stacked; W1 split by s_t / s_next)
    w2: [2H, 2H]  b2: [2H, 1]            (block-diagonal)
    w3: [2E, 2H]  b3: [2E, 1]            (block-diagonal)
    out_ref:  [1, 1, tile_n]  (1 - dones) * ||learned - fixed||_2  (lane-dense)
    """
    s = s_ref[...]                                   # [obs, tile_n]
    dt = s.dtype

    # s_next[:, j] = s[:, j + 1] within the tile (roll done in f32; values exact).
    nxt = pltpu.roll(s.astype(jnp.float32), roll_shift, 1).astype(dt)
    # Tile-boundary lane takes the first column of the next tile (halo).
    lane = jax.lax.broadcasted_iota(jnp.int32, s.shape, 1)
    halo_col = jnp.broadcast_to(halo_ref[...][:, :1], s.shape)
    nxt = jnp.where(lane == tile_n - 1, halo_col, nxt)
    # Final transition of each trajectory (t == T-1) reuses its own state.
    meta = meta_ref[0]                               # [2, tile_n] f32
    nxt = jnp.where(meta[1:2, :] != 0.0, s, nxt)

    # Fused (learned | fixed) MLP; f32 accumulation on the MXU.
    h = (jnp.dot(w1a_ref[...], s, preferred_element_type=jnp.float32)
         + jnp.dot(w1b_ref[...], nxt, preferred_element_type=jnp.float32)
         + b1_ref[...])
    h = jnp.maximum(h, 0.0).astype(dt)
    h = jnp.dot(w2_ref[...], h, preferred_element_type=jnp.float32) + b2_ref[...]
    h = jnp.maximum(h, 0.0).astype(dt)
    e = jnp.dot(w3_ref[...], h, preferred_element_type=jnp.float32) + b3_ref[...]

    diff = e[:emb_dim, :] - e[emb_dim:, :]                       # [E, tile_n]
    l2 = jnp.sqrt(jnp.sum(diff * diff, axis=0, keepdims=True))   # [1, tile_n]
    out_ref[0] = (1.0 - meta[0:1, :]) * l2


# ------------------------- Weight packing -------------------------------------

def _block_diag(a, b):
    top = jnp.concatenate([a, jnp.zeros((a.shape[0], b.shape[1]), a.dtype)], axis=1)
    bot = jnp.concatenate([jnp.zeros((b.shape[0], a.shape[1]), b.dtype), b], axis=1)
    return jnp.concatenate([top, bot], axis=0)


def _pack_params(p, obs, dtype):
    # Stored params are (fan_in, fan_out) for x @ W; kernel computes W @ x^T.
    # Layer 1 is split into the s_t half (w1a) and the s_{t+1} half (w1b);
    # learned and fixed networks are fused (stacked outputs / block-diagonal).
    w1a = jnp.concatenate([p["lw1"][:obs].T, p["fw1"][:obs].T], axis=0).astype(dtype)  # [2H, obs]
    w1b = jnp.concatenate([p["lw1"][obs:].T, p["fw1"][obs:].T], axis=0).astype(dtype)  # [2H, obs]
    w2 = _block_diag(p["lw2"].T, p["fw2"].T).astype(dtype)                   # [2H, 2H]
    w3 = _block_diag(p["lw3"].T, p["fw3"].T).astype(dtype)                   # [2E, 2H]
    b1 = jnp.concatenate([p["lb1"], p["fb1"]], axis=1).T.astype(jnp.float32)  # [2H, 1]
    b2 = jnp.concatenate([p["lb2"], p["fb2"]], axis=1).T.astype(jnp.float32)  # [2H, 1]
    b3 = jnp.concatenate([p["lb3"], p["fb3"]], axis=1).T.astype(jnp.float32)  # [2E, 1]
    return w1a, w1b, b1, w2, b2, w3, b3


# ------------------------- Wrapper ---------------------------------------------

@functools.partial(jax.jit, static_argnames=("tile_n", "compute_dtype", "roll_jnp"))
def _rnd_forward_impl(states, dones, params, *, tile_n, compute_dtype, roll_jnp):
    B, T, obs = states.shape
    N = B * T
    emb = params["lw3"].shape[1]

    # ---- static tile sizing ----
    tile_n = _round_up(max(128, int(tile_n)), 128)
    tile_n = min(tile_n, _round_up(N, 128))
    if N > 256:
        # ensure >= 2 grid tiles so the 'parallel' axis can shard over v7x's 2 TCs
        tile_n = min(tile_n, _round_up(pl.cdiv(N, 2), 128))
    n_pad = _round_up(N, tile_n)
    num_tiles = n_pad // tile_n
    bpt = tile_n // 128                      # 128-lane blocks per tile (halo spec)
    n_lane_blocks = n_pad // 128
    roll_shift = (tile_n - 1) if roll_jnp else 1

    # ---- feature-major states [obs, n_pad]; cast BEFORE transpose, then pad ----
    s_t = states.astype(compute_dtype).reshape(N, obs).T
    s_t = jnp.pad(s_t, ((0, 0), (0, n_pad - N)))

    # ---- per-column metadata: row 0 = dones, row 1 = (t == T-1) ----
    dones_p = jnp.pad(dones.astype(jnp.float32).reshape(N), (0, n_pad - N))
    last_t = ((jnp.arange(n_pad, dtype=jnp.int32) % T) == (T - 1)).astype(jnp.float32)
    meta = jnp.stack([dones_p, last_t], axis=0)
    meta = meta.reshape(2, num_tiles, tile_n).transpose(1, 0, 2)   # [tiles, 2, tile_n]

    w1a, w1b, b1, w2, b2, w3, b3 = _pack_params(params, obs, compute_dtype)
    two_h = w2.shape[0]
    two_e = w3.shape[0]

    item = jnp.dtype(compute_dtype).itemsize
    cost = pl.CostEstimate(
        flops=2 * n_pad * (2 * obs * two_h + two_h * two_h + two_h * two_e)
              + 6 * n_pad * two_e,
        transcendentals=n_pad,
        bytes_accessed=int(s_t.size) * item + int(meta.size) * 4 + n_pad * 4
                       + (int(w1a.size) + int(w1b.size) + int(w2.size) + int(w3.size)) * item
                       + (int(b1.size) + int(b2.size) + int(b3.size)) * 4,
    )

    out = pl.pallas_call(
        functools.partial(_rnd_kernel, emb_dim=emb, tile_n=tile_n,
                          roll_shift=roll_shift),
        out_shape=jax.ShapeDtypeStruct((num_tiles, 1, tile_n), jnp.float32),
        grid=(num_tiles,),
        in_specs=[
            pl.BlockSpec((obs, tile_n), lambda i: (0, i)),                  # streamed s tiles
            pl.BlockSpec((obs, 128),                                        # halo: next tile's 1st cols
                         lambda i: (0, jnp.minimum((i + 1) * bpt, n_lane_blocks - 1))),
            pl.BlockSpec((1, 2, tile_n), lambda i: (i, 0, 0)),              # dones / last-step mask
            pl.BlockSpec(w1a.shape, lambda i: (0, 0)),                      # weights: VMEM-resident
            pl.BlockSpec(w1b.shape, lambda i: (0, 0)),
            pl.BlockSpec(b1.shape, lambda i: (0, 0)),
            pl.BlockSpec(w2.shape, lambda i: (0, 0)),
            pl.BlockSpec(b2.shape, lambda i: (0, 0)),
            pl.BlockSpec(w3.shape, lambda i: (0, 0)),
            pl.BlockSpec(b3.shape, lambda i: (0, 0)),
        ],
        out_specs=pl.BlockSpec((1, 1, tile_n), lambda i: (i, 0, 0)),
        compiler_params=pltpu.CompilerParams(
            dimension_semantics=("parallel",),
            vmem_limit_bytes=32 * 1024 * 1024,
        ),
        cost_estimate=cost,
    )(s_t, s_t, meta, w1a, w1b, b1, w2, b2, w3, b3)

    return out.reshape(n_pad)[:N].reshape(B, T)


def rnd_forward(states, dones, params, *, tile_n=8192, compute_dtype=jnp.bfloat16):
    """Returns (1 - dones) * ||learned(x) - fixed(x)||_2, shape [B, T]."""
    return _rnd_forward_impl(states, dones, params, tile_n=int(tile_n),
                             compute_dtype=compute_dtype,
                             roll_jnp=_roll_matches_jnp())


# ------------------------- Deterministic parameter init ------------------------

def init_params(key, input_dim, hidden_dim, embedding_dim):
    """PyTorch-Linear-style uniform(-1/sqrt(fan_in), 1/sqrt(fan_in)) init.
    Weights stored (fan_in, fan_out); biases stored as (1, out) rows."""
    def linear(k, fan_in, fan_out):
        kw, kb = jax.random.split(k)
        bound = 1.0 / jnp.sqrt(fan_in)
        w = jax.random.uniform(kw, (fan_in, fan_out), jnp.float32, -bound, bound)
        b = jax.random.uniform(kb, (1, fan_out), jnp.float32, -bound, bound)
        return w, b

    keys = jax.random.split(key, 6)
    lw1, lb1 = linear(keys[0], input_dim, hidden_dim)
    lw2, lb2 = linear(keys[1], hidden_dim, hidden_dim)
    lw3, lb3 = linear(keys[2], hidden_dim, embedding_dim)
    fw1, fb1 = linear(keys[3], input_dim, hidden_dim)
    fw2, fb2 = linear(keys[4], hidden_dim, hidden_dim)
    fw3, fb3 = linear(keys[5], hidden_dim, embedding_dim)
    return dict(lw1=lw1, lb1=lb1, lw2=lw2, lb2=lb2, lw3=lw3, lb3=lb3,
                fw1=fw1, fb1=fb1, fw2=fw2, fb2=fb2, fw3=fw3, fb3=fb3)


# ------------------------- Pure-JAX reference ----------------------------------

def rnd_reference(states, dones, p):
    s = states.astype(jnp.float32)
    all_except_final = jnp.concatenate([s[:, :-1], s[:, 1:]], axis=-1)
    final = jnp.concatenate([s[:, -1], s[:, -1]], axis=-1)[:, None, :]
    x = jnp.concatenate([all_except_final, final], axis=1)

    def mlp(x, w1, b1, w2, b2, w3, b3):
        h = jnp.maximum(x @ w1 + b1[0], 0.0)
        h = jnp.maximum(h @ w2 + b2[0], 0.0)
        return h @ w3 + b3[0]

    le = mlp(x, p["lw1"], p["lb1"], p["lw2"], p["lb2"], p["lw3"], p["lb3"])
    fe = mlp(x, p["fw1"], p["fb1"], p["fw2"], p["fb2"], p["fw3"], p["fb3"])
    l2 = jnp.linalg.norm(le - fe, axis=-1)
    return (1.0 - dones.astype(jnp.float32)) * l2


# ------------------------- Main -------------------------------------------------

if __name__ == "__main__":
    key = jax.random.PRNGKey(0)
    hidden_dim, embedding_dim = 32, 16

    # --- Test 1: tiny shapes, f32 matmul operands, tight tolerance ---
    batch, horizon, obs_dim = 2, 8, 8
    k1, k2, k3, key = jax.random.split(key, 4)
    states = jax.random.normal(k1, (batch, horizon, obs_dim), jnp.float32)
    dones = (jax.random.uniform(k2, (batch, horizon)) < 0.3).astype(jnp.float32)
    params = init_params(k3, 2 * obs_dim, hidden_dim, embedding_dim)

    out = jax.block_until_ready(
        rnd_forward(states, dones, params, compute_dtype=jnp.float32))
    ref = rnd_reference(states, dones, params)
    assert out.shape == (batch, horizon)
    assert jnp.allclose(out, ref, atol=1e-3, rtol=1e-3), (out, ref)

    # --- Test 2: multi-tile grid (128-col tiles, cross-tile halo) + default bf16 ---
    batch, horizon, obs_dim = 4, 80, 8
    k1, k2, k3, key = jax.random.split(key, 4)
    states = jax.random.normal(k1, (batch, horizon, obs_dim), jnp.float32)
    dones = (jax.random.uniform(k2, (batch, horizon)) < 0.3).astype(jnp.float32)
    params = init_params(k3, 2 * obs_dim, hidden_dim, embedding_dim)

    out2 = jax.block_until_ready(rnd_forward(states, dones, params, tile_n=128))
    ref2 = rnd_reference(states, dones, params)
    assert out2.shape == (batch, horizon)
    assert jnp.allclose(out2, ref2, atol=5e-2, rtol=5e-2), (
        float(jnp.max(jnp.abs(out2 - ref2))))

    # --- Test 3: default tile size (auto-capped to >= 2 tiles for v7x megacore) ---
    batch, horizon, obs_dim = 8, 100, 8
    k1, k2, k3, key = jax.random.split(key, 4)
    states = jax.random.normal(k1, (batch, horizon, obs_dim), jnp.float32)
    dones = (jax.random.uniform(k2, (batch, horizon)) < 0.3).astype(jnp.float32)
    params = init_params(k3, 2 * obs_dim, hidden_dim, embedding_dim)

    out3 = jax.block_until_ready(rnd_forward(states, dones, params))
    ref3 = rnd_reference(states, dones, params)
    assert out3.shape == (batch, horizon)
    assert jnp.allclose(out3, ref3, atol=5e-2, rtol=5e-2), (
        float(jnp.max(jnp.abs(out3 - ref3))))

    print("KERNEL_OK")
</pallas_src>

<mosaic_0001>
module attributes {stable_mosaic.version = 11 : i64} {
  func.func @probe(%arg0: memref<8x128xf32, #tpu.memory_space<vmem>>, %arg1: memref<8x128xf32, #tpu.memory_space<vmem>>) attributes {dimension_semantics = [], scalar_prefetch = 0 : i64, scratch_operands = 0 : i64, tpu.core_type = #tpu.core_type<tc>} {
    %c0 = arith.constant 0 : index
    %c0_0 = arith.constant 0 : index
    %0 = vector.load %arg0[%c0, %c0_0] : memref<8x128xf32, #tpu.memory_space<vmem>>, vector<8x128xf32>
    %c1_i32 = arith.constant 1 : i32
    %1 = tpu.dynamic_rotate %0 by %c1_i32 dim 1 : vector<8x128xf32>, i32 -> vector<8x128xf32>
    %c0_1 = arith.constant 0 : index
    %c0_2 = arith.constant 0 : index
    %2 = vector.load %arg1[%c0_1, %c0_2] : memref<8x128xf32, #tpu.memory_space<vmem>>, vector<8x128xf32>
    tpu.vector_store %arg1[%c0_1, %c0_2], %1 {strides = array<i32>} : memref<8x128xf32, #tpu.memory_space<vmem>>, vector<8x128xf32>,
    return
  }
}

module attributes {stable_mosaic.version = 11 : i64} {
  func.func @_rnd_kernel(%arg0: i32, %arg1: memref<8x128xf32, #tpu.memory_space<vmem>>, %arg2: memref<8x128xf32, #tpu.memory_space<vmem>>, %arg3: memref<1x2x128xf32, #tpu.memory_space<vmem>>, %arg4: memref<64x8xf32, #tpu.memory_space<vmem>>, %arg5: memref<64x8xf32, #tpu.memory_space<vmem>>, %arg6: memref<64x1xf32, #tpu.memory_space<vmem>>, %arg7: memref<64x64xf32, #tpu.memory_space<vmem>>, %arg8: memref<64x1xf32, #tpu.memory_space<vmem>>, %arg9: memref<32x64xf32, #tpu.memory_space<vmem>>, %arg10: memref<32x1xf32, #tpu.memory_space<vmem>>, %arg11: memref<1x1x128xf32, #tpu.memory_space<vmem>>) attributes {dimension_semantics = [#tpu.dimension_semantics<parallel>], iteration_bounds = array<i64: 1>, scalar_prefetch = 0 : i64, scratch_operands = 0 : i64, tpu.core_type = #tpu.core_type<tc>, window_params = [{transform_indices = @transform_0, window_bounds = array<i64: 8, 128>}, {transform_indices = @transform_1, window_bounds = array<i64: 8, 128>}, {transform_indices = @transform_2, window_bounds = array<i64: 1, 2, 128>}, {pipeline_mode = #tpu.pipeline_mode<synchronous>, transform_indices = @transform_3, window_bounds = array<i64: 64, 8>}, {pipeline_mode = #tpu.pipeline_mode<synchronous>, transform_indices = @transform_4, window_bounds = array<i64: 64, 8>}, {pipeline_mode = #tpu.pipeline_mode<synchronous>, transform_indices = @transform_5, window_bounds = array<i64: 64, 1>}, {pipeline_mode = #tpu.pipeline_mode<synchronous>, transform_indices = @transform_6, window_bounds = array<i64: 64, 64>}, {pipeline_mode = #tpu.pipeline_mode<synchronous>, transform_indices = @transform_7, window_bounds = array<i64: 64, 1>}, {pipeline_mode = #tpu.pipeline_mode<synchronous>, transform_indices = @transform_8, window_bounds = array<i64: 32, 64>}, {pipeline_mode = #tpu.pipeline_mode<synchronous>, transform_indices = @transform_9, window_bounds = array<i64: 32, 1>}, {transform_indices = @transform_10, window_bounds = array<i64: 1, 1, 128>}]} {
    %c0 = arith.constant 0 : index
    %c0_0 = arith.constant 0 : index
    %0 = vector.load %arg1[%c0, %c0_0] : memref<8x128xf32, #tpu.memory_space<vmem>>, vector<8x128xf32>
    %c127_i32 = arith.constant 127 : i32
    %1 = tpu.dynamic_rotate %0 by %c127_i32 dim 1 : vector<8x128xf32>, i32 -> vector<8x128xf32>
    %2 = tpu.iota {dimensions = array<i32: 1>} : vector<8x128xi32>
    %c0_1 = arith.constant 0 : index
    %c0_2 = arith.constant 0 : index
    %3 = vector.load %arg2[%c0_1, %c0_2] : memref<8x128xf32, #tpu.memory_space<vmem>>, vector<8x128xf32>
    %4 = vector.extract_strided_slice %3 {offsets = [0, 0], sizes = [8, 1], strides = [1, 1]} : vector<8x128xf32> to vector<8x1xf32>
    %5 = vector.shape_cast %4 : vector<8x1xf32> to vector<8x1xf32>
    %6 = vector.broadcast %5 : vector<8x1xf32> to vector<8x128xf32>
    %c127_i32_3 = arith.constant 127 : i32
    %7 = vector.broadcast %c127_i32_3 : i32 to vector<8x128xi32>
    %8 = arith.cmpi eq, %2, %7 : vector<8x128xi32>
    %9 = arith.select %8, %6, %1 : vector<8x128xi1>, vector<8x128xf32>
    %c0_4 = arith.constant 0 : index
    %c0_5 = arith.constant 0 : index
    %c0_6 = arith.constant 0 : index
    %10 = vector.load %arg3[%c0_4, %c0_5, %c0_6] : memref<1x2x128xf32, #tpu.memory_space<vmem>>, vector<1x2x128xf32>
    %11 = vector.shape_cast %10 : vector<1x2x128xf32> to vector<2x128xf32>
    %12 = vector.extract_strided_slice %11 {offsets = [1, 0], sizes = [1, 128], strides = [1, 1]} : vector<2x128xf32> to vector<1x128xf32>
    %cst = arith.constant 0.000000e+00 : f32
    %13 = vector.broadcast %cst : f32 to vector<1x128xf32>
    %14 = arith.cmpf one, %12, %13 : vector<1x128xf32>
    %15 = vector.shape_cast %14 : vector<1x128xi1> to vector<1x128xi1>
    %16 = vector.broadcast %15 : vector<1x128xi1> to vector<8x128xi1>
    %17 = arith.select %16, %0, %9 : vector<8x128xi1>, vector<8x128xf32>
    %c0_7 = arith.constant 0 : index
    %c0_8 = arith.constant 0 : index
    %18 = vector.load %arg4[%c0_7, %c0_8] : memref<64x8xf32, #tpu.memory_space<vmem>>, vector<64x8xf32>
    %cst_9 = arith.constant dense<0.000000e+00> : vector<64x128xf32>
    %19 = tpu.matmul %18, %0, %cst_9 {dimension_numbers = #tpu.dot_dimension_numbers<[1], [0], [0], [1], [0, 0, 1, 1], [], []>} : vector<64x8xf32>, vector<8x128xf32>, vector<64x128xf32> -> vector<64x128xf32>
    %c0_10 = arith.constant 0 : index
    %c0_11 = arith.constant 0 : index
    %20 = vector.load %arg5[%c0_10, %c0_11] : memref<64x8xf32, #tpu.memory_space<vmem>>, vector<64x8xf32>
    %cst_12 = arith.constant dense<0.000000e+00> : vector<64x128xf32>
    %21 = tpu.matmul %20, %17, %cst_12 {dimension_numbers = #tpu.dot_dimension_numbers<[1], [0], [0], [1], [0, 0, 1, 1], [], []>} : vector<64x8xf32>, vector<8x128xf32>, vector<64x128xf32> -> vector<64x128xf32>
    %22 = arith.addf %19, %21 : vector<64x128xf32>
    %c0_13 = arith.constant 0 : index
    %c0_14 = arith.constant 0 : index
    %23 = vector.load %arg6[%c0_13, %c0_14] : memref<64x1xf32, #tpu.memory_space<vmem>>, vector<64x1xf32>
    %24 = vector.broadcast %23 : vector<64x1xf32> to vector<64x128xf32>
    %25 = arith.addf %22, %24 : vector<64x128xf32>
    %cst_15 = arith.constant 0.000000e+00 : f32
    %26 = vector.broadcast %cst_15 : f32 to vector<64x128xf32>
    %27 = arith.maximumf %25, %26 : vector<64x128xf32>
    %c0_16 = arith.constant 0 : index
    %c0_17 = arith.constant 0 : index
    %28 = vector.load %arg7[%c0_16, %c0_17] : memref<64x64xf32, #tpu.memory_space<vmem>>, vector<64x64xf32>
    %cst_18 = arith.constant dense<0.000000e+00> : vector<64x128xf32>
    %29 = tpu.matmul %28, %27, %cst_18 {dimension_numbers = #tpu.dot_dimension_numbers<[1], [0], [0], [1], [0, 0, 1, 1], [], []>} : vector<64x64xf32>, vector<64x128xf32>, vector<64x128xf32> -> vector<64x128xf32>
    %c0_19 = arith.constant 0 : index
    %c0_20 = arith.constant 0 : index
    %30 = vector.load %arg8[%c0_19, %c0_20] : memref<64x1xf32, #tpu.memory_space<vmem>>, vector<64x1xf32>
    %31 = vector.broadcast %30 : vector<64x1xf32> to vector<64x128xf32>
    %32 = arith.addf %29, %31 : vector<64x128xf32>
    %cst_21 = arith.constant 0.000000e+00 : f32
    %33 = vector.broadcast %cst_21 : f32 to vector<64x128xf32>
    %34 = arith.maximumf %32, %33 : vector<64x128xf32>
    %c0_22 = arith.constant 0 : index
    %c0_23 = arith.constant 0 : index
    %35 = vector.load %arg9[%c0_22, %c0_23] : memref<32x64xf32, #tpu.memory_space<vmem>>, vector<32x64xf32>
    %cst_24 = arith.constant dense<0.000000e+00> : vector<32x128xf32>
    %36 = tpu.matmul %35, %34, %cst_24 {dimension_numbers = #tpu.dot_dimension_numbers<[1], [0], [0], [1], [0, 0, 1, 1], [], []>} : vector<32x64xf32>, vector<64x128xf32>, vector<32x128xf32> -> vector<32x128xf32>
    %c0_25 = arith.constant 0 : index
    %c0_26 = arith.constant 0 : index
    %37 = vector.load %arg10[%c0_25, %c0_26] : memref<32x1xf32, #tpu.memory_space<vmem>>, vector<32x1xf32>
    %38 = vector.broadcast %37 : vector<32x1xf32> to vector<32x128xf32>
    %39 = arith.addf %36, %38 : vector<32x128xf32>
    %40 = vector.extract_strided_slice %39 {offsets = [0, 0], sizes = [16, 128], strides = [1, 1]} : vector<32x128xf32> to vector<16x128xf32>
    %41 = vector.extract_strided_slice %39 {offsets = [16, 0], sizes = [16, 128], strides = [1, 1]} : vector<32x128xf32> to vector<16x128xf32>
    %42 = arith.subf %40, %41 : vector<16x128xf32>
    %43 = arith.mulf %42, %42 : vector<16x128xf32>
    %cst_27 = arith.constant dense<0.000000e+00> : vector<128xf32>
    %44 = vector.multi_reduction <add>, %43, %cst_27 [0] : vector<16x128xf32> to vector<128xf32>
    %45 = vector.shape_cast %44 : vector<128xf32> to vector<1x128xf32>
    %46 = math.sqrt %45 : vector<1x128xf32>
    %47 = vector.extract_strided_slice %11 {offsets = [0, 0], sizes = [1, 128], strides = [1, 1]} : vector<2x128xf32> to vector<1x128xf32>
    %cst_28 = arith.constant 1.000000e+00 : f32
    %48 = vector.broadcast %cst_28 : f32 to vector<1x128xf32>
    %49 = arith.subf %48, %47 : vector<1x128xf32>
    %50 = arith.mulf %49, %46 : vector<1x128xf32>
    %c0_29 = arith.constant 0 : index
    %c0_30 = arith.constant 0 : index
    %c0_31 = arith.constant 0 : index
    %51 = vector.load %arg11[%c0_29, %c0_30, %c0_31] : memref<1x1x128xf32, #tpu.memory_space<vmem>>, vector<1x1x128xf32>
    %52 = vector.shape_cast %51 : vector<1x1x128xf32> to vector<1x128xf32>
    %53 = vector.shape_cast %50 : vector<1x128xf32> to vector<1x1x128xf32>
    tpu.vector_store %arg11[%c0_29, %c0_30, %c0_31], %53 {strides = array<i32>} : memref<1x1x128xf32, #tpu.memory_space<vmem>>, vector<1x1x128xf32>,
    return
  }
  func.func @transform_0(%arg0: i32) -> (i32, i32) {
    %c0_i32 = arith.constant 0 : i32
    %c0_i32_0 = arith.constant 0 : i32
    return %c0_i32, %arg0 : i32, i32
  }
  func.func @transform_1(%arg0: i32) -> (i32, i32) {
    %c1_i32 = arith.constant 1 : i32
    %0 = arith.addi %arg0, %c1_i32 : i32
    %c1_i32_0 = arith.constant 1 : i32
    %1 = arith.muli %0, %c1_i32_0 : i32
    %c0_i32 = arith.constant 0 : i32
    %2 = arith.minsi %1, %c0_i32 : i32
    %c0_i32_1 = arith.constant 0 : i32
    %c0_i32_2 = arith.constant 0 : i32
    return %c0_i32_1, %2 : i32, i32
  }
  func.func @transform_2(%arg0: i32) -> (i32, i32, i32) {
    %c0_i32 = arith.constant 0 : i32
    %c0_i32_0 = arith.constant 0 : i32
    %c0_i32_1 = arith.constant 0 : i32
    return %arg0, %c0_i32, %c0_i32_0 : i32, i32, i32
  }
  func.func @transform_3(%arg0: i32) -> (i32, i32) {
    %c0_i32 = arith.constant 0 : i32
    %c0_i32_0 = arith.constant 0 : i32
    %c0_i32_1 = arith.constant 0 : i32
    return %c0_i32, %c0_i32_0 : i32, i32
  }
  func.func @transform_4(%arg0: i32) -> (i32, i32) {
    %c0_i32 = arith.constant 0 : i32
    %c0_i32_0 = arith.constant 0 : i32
    %c0_i32_1 = arith.constant 0 : i32
    return %c0_i32, %c0_i32_0 : i32, i32
  }
  func.func @transform_5(%arg0: i32) -> (i32, i32) {
    %c0_i32 = arith.constant 0 : i32
    %c0_i32_0 = arith.constant 0 : i32
    %c0_i32_1 = arith.constant 0 : i32
    return %c0_i32, %c0_i32_0 : i32, i32
  }
  func.func @transform_6(%arg0: i32) -> (i32, i32) {
    %c0_i32 = arith.constant 0 : i32
    %c0_i32_0 = arith.constant 0 : i32
    %c0_i32_1 = arith.constant 0 : i32
    return %c0_i32, %c0_i32_0 : i32, i32
  }
  func.func @transform_7(%arg0: i32) -> (i32, i32) {
    %c0_i32 = arith.constant 0 : i32
    %c0_i32_0 = arith.constant 0 : i32
    %c0_i32_1 = arith.constant 0 : i32
    return %c0_i32, %c0_i32_0 : i32, i32
  }
  func.func @transform_8(%arg0: i32) -> (i32, i32) {
    %c0_i32 = arith.constant 0 : i32
    %c0_i32_0 = arith.constant 0 : i32
    %c0_i32_1 = arith.constant 0 : i32
    return %c0_i32, %c0_i32_0 : i32, i32
  }
  func.func @transform_9(%arg0: i32) -> (i32, i32) {
    %c0_i32 = arith.constant 0 : i32
    %c0_i32_0 = arith.constant 0 : i32
    %c0_i32_1 = arith.constant 0 : i32
    return %c0_i32, %c0_i32_0 : i32, i32
  }
  func.func @transform_10(%arg0: i32) -> (i32, i32, i32) {
    %c0_i32 = arith.constant 0 : i32
    %c0_i32_0 = arith.constant 0 : i32
    %c0_i32_1 = arith.constant 0 : i32
    return %arg0, %c0_i32, %c0_i32_0 : i32, i32, i32
  }
}

</mosaic_0001>

<llo_original>
// kernel: tpu_custom_call.1
$region0: #{tpu_custom_call.1}
  #allocation0 [shape = 'u32[]', space=smem, size = 0x4, offset = 0x4, fixed_abs, tag = 'smem constant byte address 0x4 - core index']
  #allocation1 [shape = 'u32[72,128]{1,0:T(1,128)}', space=vmem, size = 0x9000, scoped, tag = 'internal scratch']
  %s0 = inlined_call_operand.hbm [shape: f32[8,128], index: 0, kind: input, shape index: {}]
  %s1 = inlined_call_operand.hbm [shape: f32[8,128], index: 1, kind: output, shape index: {}]
  %s2 = sld [smem:[#allocation0]]
  $region18: #{tpu_custom_call.1} parent=0
    _
  %s4 = ssub.s32 1, %s2
  %s5 = scalar_select 0, %s4, %s2
  $region1: #{tpu_custom_call.1} parent=0
    #allocation2 [shape = 'u8[4096]{0}', space=vmem, size = 0x1000, scoped, tag = 'input window, operand 0, single buffered']
    #allocation3 [shape = 's32[1]{0}', space=sflag, size = 0x4, scoped, tag = 'scoped memory for tpu_custom_call.1']
    #allocation4 [shape = 's32[1]{0}', space=sflag, size = 0x4, scoped, tag = 'scoped memory for tpu_custom_call.1']
    #allocation5 [shape = 'u8[4096]{0}', space=vmem, size = 0x1000, scoped, tag = 'output window, operand 0, single buffered']
    %6 = vsyncpa [#allocation3], 0
    %7 = vsyncpa [#allocation4], 0
    // Predicated region
    $region2: #{tpu_custom_call.1} parent=1 // pred_check
      _
    $region3: #{tpu_custom_call.1} parent=1 // pred_check_branch
      %9 = sbr.rel (0) target = $region5
    $region4: #{tpu_custom_call.1} parent=1 // pred_region
      %11 = vsyncadd [#allocation3], 0
      %s13 = sshll.u32 %s0, 4
      %s14 = int_to_ptr.hbm [resolvable:$true] %s13
      %s15 = sshll.u32 [#allocation2], 4
      %s16 = int_to_ptr.vmem [resolvable:$true] %s15
      %18 = dma.hbm_to_vmem [thread:$0]  %s14, 128, %s16, [#allocation3]
    $region5: #{tpu_custom_call.1} parent=1 // pred_fallthru
      _
    // Predicated region
    $region6: #{tpu_custom_call.1} parent=1 // pred_check
      _
    $region7: #{tpu_custom_call.1} parent=1 // pred_check_branch
      %20 = sbr.rel (0) target = $region9
    $region8: #{tpu_custom_call.1} parent=1 // pred_region
      %22 = dma.done [#allocation3], 128
    $region9: #{tpu_custom_call.1} parent=1 // pred_fallthru
      _
    %v23 = vld [vmem:[#allocation2] sm:$0xff]
    %24 = vrot.lane.b32.xlu0 %v23, 1
    %v25 = vpop.permute.xlu0 %24
    %26 = vst [vmem:[#allocation5] sm:$0xff] %v25
    // Predicated region
    $region10: #{tpu_custom_call.1} parent=1 // pred_check
      _
    $region11: #{tpu_custom_call.1} parent=1 // pred_check_branch
      %28 = sbr.rel (0) target = $region13
    $region12: #{tpu_custom_call.1} parent=1 // pred_region
      %30 = vsyncadd [#allocation4], 0
      %s32 = sshll.u32 [#allocation5], 4
      %s33 = int_to_ptr.vmem [resolvable:$true] %s32
      %s34 = sshll.u32 %s1, 4
      %s35 = int_to_ptr.hbm [resolvable:$true] %s34
      %37 = dma.vmem_to_hbm [thread:$0]  %s33, 128, %s35, [#allocation4]
    $region13: #{tpu_custom_call.1} parent=1 // pred_fallthru
      _
    // Predicated region
    $region14: #{tpu_custom_call.1} parent=1 // pred_check
      _
    $region15: #{tpu_custom_call.1} parent=1 // pred_check_branch
      %39 = sbr.rel (0) target = $region17
    $region16: #{tpu_custom_call.1} parent=1 // pred_region
      %41 = dma.done [#allocation4], 128
    $region17: #{tpu_custom_call.1} parent=1 // pred_fallthru
      _
    %42 = vsyncpa [#allocation3], 1
    %43 = vsyncpa [#allocation4], 1

// kernel: _rnd_forward_impl.1
$region0: #{_rnd_forward_impl.1}
  #allocation0 [shape = 'u32[]', space=smem, size = 0x4, offset = 0x4, fixed_abs, tag = 'smem constant byte address 0x4 - core index']
  #allocation1 [shape = 'u32[72,128]{1,0:T(1,128)}', space=vmem, size = 0x9000, scoped, tag = 'internal scratch']
  %s0 = inlined_call_operand.vmem [shape: f32[8,128], index: 0, kind: input, shape index: {}, may-alias: {0,1}]
  %s1 = inlined_call_operand.vmem [shape: f32[8,128], index: 1, kind: input, shape index: {}, may-alias: {0,1}]
  %s2 = inlined_call_operand.vmem [shape: f32[1,2,128], index: 2, kind: input, shape index: {}]
  %s3 = inlined_call_operand.vmem [shape: f32[64,8], index: 3, kind: input, shape index: {}]
  %s4 = inlined_call_operand.vmem [shape: f32[64,8], index: 4, kind: input, shape index: {}]
  %s5 = inlined_call_operand.vmem [shape: f32[64,1], index: 5, kind: input, shape index: {}]
  %s6 = inlined_call_operand.vmem [shape: f32[64,64], index: 6, kind: input, shape index: {}]
  %s7 = inlined_call_operand.vmem [shape: f32[64,1], index: 7, kind: input, shape index: {}]
  %s8 = inlined_call_operand.vmem [shape: f32[32,64], index: 8, kind: input, shape index: {}]
  %s9 = inlined_call_operand.vmem [shape: f32[32,1], index: 9, kind: input, shape index: {}]
  %s10 = inlined_call_operand.vmem [shape: f32[1,1,128], index: 10, kind: output, shape index: {}]
  %s11 = sld [smem:[#allocation0]]
  $region50: #{_rnd_forward_impl.1} parent=0
    _
  %s13 = ssub.s32 1, %s11
  %s14 = scalar_select 0, %s13, %s11
  // Predicated region
  $region2: #{_rnd_forward_impl.1} parent=0 // pred_check
    _
  $region3: #{_rnd_forward_impl.1} parent=0 // pred_check_branch
    %16 = sbr.rel (0) target = $region5
  $region4: #{_rnd_forward_impl.1} parent=0 // pred_region
    _
  $region5: #{_rnd_forward_impl.1} parent=0 // pred_fallthru
    _
  // Predicated region
  $region6: #{_rnd_forward_impl.1} parent=0 // pred_check
    _
  $region7: #{_rnd_forward_impl.1} parent=0 // pred_check_branch
    %18 = sbr.rel (0) target = $region9
  $region8: #{_rnd_forward_impl.1} parent=0 // pred_region
    %s19 = sadd.s32 0, 1
    %p20 = scmp.lt.s32.totalorder %s19, 0
    %s21 = scalar_select %p20, %s19, 0
    %p22 = scmp.lt.s32.totalorder %s21, 0
    %s23 = scalar_select %p22, %s21, 0
    %s24 = smul.addr %s23, 8
    %s25 = scalar_lea.vmem %s1, %s24
    %s26 = sadd.s32 0, 1
    %p27 = scmp.lt.s32.totalorder %s26, 0
    %s28 = scalar_select %p27, %s26, 0
  $region9: #{_rnd_forward_impl.1} parent=0 // pred_fallthru
    _
  // Predicated region
  $region10: #{_rnd_forward_impl.1} parent=0 // pred_check
    _
  $region11: #{_rnd_forward_impl.1} parent=0 // pred_check_branch
    %30 = sbr.rel (0) target = $region13
  $region12: #{_rnd_forward_impl.1} parent=0 // pred_region
    _
  $region13: #{_rnd_forward_impl.1} parent=0 // pred_fallthru
    _
  // Predicated region
  $region14: #{_rnd_forward_impl.1} parent=0 // pred_check
    _
  $region15: #{_rnd_forward_impl.1} parent=0 // pred_check_branch
    %32 = sbr.rel (0) target = $region17
  $region16: #{_rnd_forward_impl.1} parent=0 // pred_region
    _
  $region17: #{_rnd_forward_impl.1} parent=0 // pred_fallthru
    _
  // Predicated region
  $region18: #{_rnd_forward_impl.1} parent=0 // pred_check
    _
  $region19: #{_rnd_forward_impl.1} parent=0 // pred_check_branch
    %34 = sbr.rel (0) target = $region21
  $region20: #{_rnd_forward_impl.1} parent=0 // pred_region
    _
  $region21: #{_rnd_forward_impl.1} parent=0 // pred_fallthru
    _
  // Predicated region
  $region22: #{_rnd_forward_impl.1} parent=0 // pred_check
    _
  $region23: #{_rnd_forward_impl.1} parent=0 // pred_check_branch
    %36 = sbr.rel (0) target = $region25
  $region24: #{_rnd_forward_impl.1} parent=0 // pred_region
    _
  $region25: #{_rnd_forward_impl.1} parent=0 // pred_fallthru
    _
  // Predicated region
  $region26: #{_rnd_forward_impl.1} parent=0 // pred_check
    _
  $region27: #{_rnd_forward_impl.1} parent=0 // pred_check_branch
    %38 = sbr.rel (0) target = $region29
  $region28: #{_rnd_forward_impl.1} parent=0 // pred_region
    _
  $region29: #{_rnd_forward_impl.1} parent=0 // pred_fallthru
    _
  // Predicated region
  $region30: #{_rnd_forward_impl.1} parent=0 // pred_check
    _
  $region31: #{_rnd_forward_impl.1} parent=0 // pred_check_branch
    %40 = sbr.rel (0) target = $region33
  $region32: #{_rnd_forward_impl.1} parent=0 // pred_region
    _
  $region33: #{_rnd_forward_impl.1} parent=0 // pred_fallthru
    _
  // Predicated region
  $region34: #{_rnd_forward_impl.1} parent=0 // pred_check
    _
  $region35: #{_rnd_forward_impl.1} parent=0 // pred_check_branch
    %42 = sbr.rel (0) target = $region37
  $region36: #{_rnd_forward_impl.1} parent=0 // pred_region
    _
  $region37: #{_rnd_forward_impl.1} parent=0 // pred_fallthru
    _
  // Predicated region
  $region38: #{_rnd_forward_impl.1} parent=0 // pred_check
    _
  $region39: #{_rnd_forward_impl.1} parent=0 // pred_check_branch
    %44 = sbr.rel (0) target = $region41
  $region40: #{_rnd_forward_impl.1} parent=0 // pred_region
    _
  $region41: #{_rnd_forward_impl.1} parent=0 // pred_fallthru
    _
  %s45 = sadd.s32 0, 1
  %p46 = scmp.lt.s32.totalorder %s45, 0
  %s47 = scalar_select %p46, %s45, 0
  %p48 = scmp.lt.s32.totalorder %s47, 0
  %s49 = scalar_select %p48, %s47, 0
  %s50 = smul.addr %s49, 8
  %s51 = scalar_lea.vmem %s1, %s50
  %s52 = sadd.s32 0, 1
  %p53 = scmp.lt.s32.totalorder %s52, 0
  %s54 = scalar_select %p53, %s52, 0
  %p55 = scmp.lt.s32.totalorder %s54, 0
  %s56 = scalar_select %p55, %s54, 0
  %s57 = smul.addr %s56, 8
  %s58 = scalar_lea.vmem %s1, %s57
  %s59 = sadd.s32 0, 1
  %p60 = scmp.lt.s32.totalorder %s59, 0
  %s61 = scalar_select %p60, %s59, 0
  %v62 = vld [vmem:[%s0] sm:$0xff]
  %63 = vrot.lane.b32.xlu0 %v62, 127
  %v64 = vpop.permute.xlu0 %63
  %v65 = vlaneseq
  %v66 = vand.u32 %v65, 127
  %v67 = vld [vmem:[%s58] sm:$0xff]
  %69 = vset.pattern.permute.xlu0 0
  %70 = vperm.xlu0 %69, %v67
  %v71 = vpop.permute.xlu0 %70
  %vm73 = vcmp.eq.s32.totalorder %v66, 127
  %v74 = vsel %vm73, %v71, %v64
  %v75 = vld [vmem:[%s2] sm:$0x3]
  %vm76 = vcmp.ne.f32.partialorder %v75, 0.0
  %v77 = vsel %vm76, 1, 0
  %v78 = vperm.slane %v77, 1
  %vm79 = vcmp.eq.s32.totalorder %v78, 1
  %v80 = vsel %vm79, %v62, %v74
  %v81 = vld [vmem:[%s3] sm:$0xff]
  %v82 = vld [vmem:[%s3 + $0x8] sm:$0xff]
  %v83 = vld [vmem:[%s3 + $0x10] sm:$0xff]
  %v84 = vld [vmem:[%s3 + $0x18] sm:$0xff]
  %v85 = vld [vmem:[%s3 + $0x20] sm:$0xff]
  %v86 = vld [vmem:[%s3 + $0x28] sm:$0xff]
  %v87 = vld [vmem:[%s3 + $0x30] sm:$0xff]
  %v88 = vld [vmem:[%s3 + $0x38] sm:$0xff]
  %v89 = vld [vmem:[%s4] sm:$0xff]
  %v90 = vld [vmem:[%s4 + $0x8] sm:$0xff]
  %v91 = vld [vmem:[%s4 + $0x10] sm:$0xff]
  %v92 = vld [vmem:[%s4 + $0x18] sm:$0xff]
  %v93 = vld [vmem:[%s4 + $0x20] sm:$0xff]
  %v94 = vld [vmem:[%s4 + $0x28] sm:$0xff]
  %v95 = vld [vmem:[%s4 + $0x30] sm:$0xff]
  %v96 = vld [vmem:[%s4 + $0x38] sm:$0xff]
  %vm97 = vcmask 64512
  %v99 = vsel %vm97, %v89, 0
  %v102 = vsel %vm97, %v90, 0
  %v105 = vsel %vm97, %v91, 0
  %v108 = vsel %vm97, %v92, 0
  %v111 = vsel %vm97, %v93, 0
  %v114 = vsel %vm97, %v94, 0
  %v117 = vsel %vm97, %v95, 0
  %v120 = vsel %vm97, %v96, 0
  %122 = vmatpush.msra.mxu0 0.0
  %123 = vmatpush.msra.mxu0 0.0
  %124 = vmatpush.msra.mxu0 0.0
  %125 = vmatpush.msra.mxu0 0.0
  %126 = vmatpush.msra.mxu0 0.0
  %127 = vmatpush.msra.mxu0 0.0
  %128 = vmatpush.msra.mxu0 0.0
  %129 = vmatpush.msra.mxu0 0.0
  %130 = vmatpush.msra.mxu0 0.0
  %131 = vmatpush.msra.mxu0 0.0
  %132 = vmatpush.msra.mxu0 0.0
  %133 = vmatpush.msra.mxu0 0.0
  %134 = vmatpush.msra.mxu0 0.0
  %135 = vmatpush.msra.mxu0 0.0
  %136 = vmatpush.msra.mxu0 0.0
  %137 = vmatpush.msra.mxu0 %v80
  %138 = vmatmul.f32.gmra.mxu0 %v99
  %v139 = vpop.f32.mrf.mxu0
  %v140 = vadd.f32 0.0, %v139
  %141 = vmatmul.f32.gmra.mxu0 %v102
  %v142 = vpop.f32.mrf.mxu0
  %v143 = vadd.f32 0.0, %v142
  %144 = vmatmul.f32.gmra.mxu0 %v105
  %v145 = vpop.f32.mrf.mxu0
  %v146 = vadd.f32 0.0, %v145
  %147 = vmatmul.f32.gmra.mxu0 %v108
  %v148 = vpop.f32.mrf.mxu0
  %v149 = vadd.f32 0.0, %v148
  %150 = vmatmul.f32.gmra.mxu0 %v111
  %v151 = vpop.f32.mrf.mxu0
  %v152 = vadd.f32 0.0, %v151
  %153 = vmatmul.f32.gmra.mxu0 %v114
  %v154 = vpop.f32.mrf.mxu0
  %v155 = vadd.f32 0.0, %v154
  %156 = vmatmul.f32.gmra.mxu0 %v117
  %v157 = vpop.f32.mrf.mxu0
  %v158 = vadd.f32 0.0, %v157
  %159 = vmatmul.f32.gmra.mxu0 %v120
  %v160 = vpop.f32.mrf.mxu0
  %v161 = vadd.f32 0.0, %v160
  %162 = vdwg.mxu0
  %v164 = vsel %vm97, %v81, 0
  %v167 = vsel %vm97, %v82, 0
  %v170 = vsel %vm97, %v83, 0
  %v173 = vsel %vm97, %v84, 0
  %v176 = vsel %vm97, %v85, 0
  %v179 = vsel %vm97, %v86, 0
  %v182 = vsel %vm97, %v87, 0
  %v185 = vsel %vm97, %v88, 0
  %187 = vmatpush.msra.mxu0 0.0
  %188 = vmatpush.msra.mxu0 0.0
  %189 = vmatpush.msra.mxu0 0.0
  %190 = vmatpush.msra.mxu0 0.0
  %191 = vmatpush.msra.mxu0 0.0
  %192 = vmatpush.msra.mxu0 0.0
  %193 = vmatpush.msra.mxu0 0.0
  %194 = vmatpush.msra.mxu0 0.0
  %195 = vmatpush.msra.mxu0 0.0
  %196 = vmatpush.msra.mxu0 0.0
  %197 = vmatpush.msra.mxu0 0.0
  %198 = vmatpush.msra.mxu0 0.0
  %199 = vmatpush.msra.mxu0 0.0
  %200 = vmatpush.msra.mxu0 0.0
  %201 = vmatpush.msra.mxu0 0.0
  %202 = vmatpush.msra.mxu0 %v62
  %203 = vmatmul.f32.gmra.mxu0 %v164
  %v204 = vpop.f32.mrf.mxu0
  %v205 = vadd.f32 %v140, %v204
  %206 = vmatmul.f32.gmra.mxu0 %v167
  %v207 = vpop.f32.mrf.mxu0
  %v208 = vadd.f32 %v143, %v207
  %209 = vmatmul.f32.gmra.mxu0 %v170
  %v210 = vpop.f32.mrf.mxu0
  %v211 = vadd.f32 %v146, %v210
  %212 = vmatmul.f32.gmra.mxu0 %v173
  %v213 = vpop.f32.mrf.mxu0
  %v214 = vadd.f32 %v149, %v213
  %215 = vmatmul.f32.gmra.mxu0 %v176
  %v216 = vpop.f32.mrf.mxu0
  %v217 = vadd.f32 %v152, %v216
  %218 = vmatmul.f32.gmra.mxu0 %v179
  %v219 = vpop.f32.mrf.mxu0
  %v220 = vadd.f32 %v155, %v219
  %221 = vmatmul.f32.gmra.mxu0 %v182
  %v222 = vpop.f32.mrf.mxu0
  %v223 = vadd.f32 %v158, %v222
  %224 = vmatmul.f32.gmra.mxu0 %v185
  %v225 = vpop.f32.mrf.mxu0
  %v226 = vadd.f32 %v161, %v225
  %227 = vdwg.mxu0
  %v228 = vld [vmem:[%s5] sm:$0xff]
  %v229 = vld [vmem:[%s5 + $0x8] sm:$0xff]
  %v230 = vld [vmem:[%s5 + $0x10] sm:$0xff]
  %v231 = vld [vmem:[%s5 + $0x18] sm:$0xff]
  %v232 = vld [vmem:[%s5 + $0x20] sm:$0xff]
  %v233 = vld [vmem:[%s5 + $0x28] sm:$0xff]
  %v234 = vld [vmem:[%s5 + $0x30] sm:$0xff]
  %v235 = vld [vmem:[%s5 + $0x38] sm:$0xff]
  %237 = vset.pattern.permute.xlu0 0
  %238 = vperm.xlu0 %237, %v228
  %v239 = vpop.permute.xlu0 %238
  %242 = vset.pattern.permute.xlu0 0
  %243 = vperm.xlu0 %242, %v229
  %v244 = vpop.permute.xlu0 %243
  %247 = vset.pattern.permute.xlu0 0
  %248 = vperm.xlu0 %247, %v230
  %v249 = vpop.permute.xlu0 %248
  %252 = vset.pattern.permute.xlu0 0
  %253 = vperm.xlu0 %252, %v231
  %v254 = vpop.permute.xlu0 %253
  %257 = vset.pattern.permute.xlu0 0
  %258 = vperm.xlu0 %257, %v232
  %v259 = vpop.permute.xlu0 %258
  %262 = vset.pattern.permute.xlu0 0
  %263 = vperm.xlu0 %262, %v233
  %v264 = vpop.permute.xlu0 %263
  %267 = vset.pattern.permute.xlu0 0
  %268 = vperm.xlu0 %267, %v234
  %v269 = vpop.permute.xlu0 %268
  %272 = vset.pattern.permute.xlu0 0
  %273 = vperm.xlu0 %272, %v235
  %v274 = vpop.permute.xlu0 %273
  %v276 = vadd.f32 %v205, %v239
  %v277 = vadd.f32 %v208, %v244
  %v278 = vadd.f32 %v211, %v249
  %v279 = vadd.f32 %v214, %v254
  %v280 = vadd.f32 %v217, %v259
  %v281 = vadd.f32 %v220, %v264
  %v282 = vadd.f32 %v223, %v269
  %v283 = vadd.f32 %v226, %v274
  %v284 = vmax.f32 %v276, 0.0
  %v285 = vmax.f32 %v277, 0.0
  %v286 = vmax.f32 %v278, 0.0
  %v287 = vmax.f32 %v279, 0.0
  %v288 = vmax.f32 %v280, 0.0
  %v289 = vmax.f32 %v281, 0.0
  %v290 = vmax.f32 %v282, 0.0
  %v291 = vmax.f32 %v283, 0.0
  %v292 = vld [vmem:[%s6] sm:$0xff]
  %v293 = vld [vmem:[%s6 + $0x8] sm:$0xff]
  %v294 = vld [vmem:[%s6 + $0x10] sm:$0xff]
  %v295 = vld [vmem:[%s6 + $0x18] sm:$0xff]
  %v296 = vld [vmem:[%s6 + $0x20] sm:$0xff]
  %v297 = vld [vmem:[%s6 + $0x28] sm:$0xff]
  %v298 = vld [vmem:[%s6 + $0x30] sm:$0xff]
  %v299 = vld [vmem:[%s6 + $0x38] sm:$0xff]
  %v300 = vld [vmem:[%s7] sm:$0xff]
  %v301 = vld [vmem:[%s7 + $0x8] sm:$0xff]
  %v302 = vld [vmem:[%s7 + $0x10] sm:$0xff]
  %v303 = vld [vmem:[%s7 + $0x18] sm:$0xff]
  %v304 = vld [vmem:[%s7 + $0x20] sm:$0xff]
  %v305 = vld [vmem:[%s7 + $0x28] sm:$0xff]
  %v306 = vld [vmem:[%s7 + $0x30] sm:$0xff]
  %v307 = vld [vmem:[%s7 + $0x38] sm:$0xff]
  %309 = vset.pattern.permute.xlu0 0
  %310 = vperm.xlu0 %309, %v300
  %v311 = vpop.permute.xlu0 %310
  %314 = vset.pattern.permute.xlu0 0
  %315 = vperm.xlu0 %314, %v301
  %v316 = vpop.permute.xlu0 %315
  %319 = vset.pattern.permute.xlu0 0
  %320 = vperm.xlu0 %319, %v302
  %v321 = vpop.permute.xlu0 %320
  %324 = vset.pattern.permute.xlu0 0
  %325 = vperm.xlu0 %324, %v303
  %v326 = vpop.permute.xlu0 %325
  %329 = vset.pattern.permute.xlu0 0
  %330 = vperm.xlu0 %329, %v304
  %v331 = vpop.permute.xlu0 %330
  %334 = vset.pattern.permute.xlu0 0
  %335 = vperm.xlu0 %334, %v305
  %v336 = vpop.permute.xlu0 %335
  %339 = vset.pattern.permute.xlu0 0
  %340 = vperm.xlu0 %339, %v306
  %v341 = vpop.permute.xlu0 %340
  %344 = vset.pattern.permute.xlu0 0
  %345 = vperm.xlu0 %344, %v307
  %v346 = vpop.permute.xlu0 %345
  %vm348 = vcmask 523264
  %v350 = vsel %vm348, %v292, 0
  %v353 = vsel %vm348, %v293, 0
  %v356 = vsel %vm348, %v294, 0
  %v359 = vsel %vm348, %v295, 0
  %v362 = vsel %vm348, %v296, 0
  %v365 = vsel %vm348, %v297, 0
  %v368 = vsel %vm348, %v298, 0
  %v371 = vsel %vm348, %v299, 0
  %373 = vmatpush.msra.mxu0 0.0
  %374 = vmatpush.msra.mxu0 0.0
  %375 = vmatpush.msra.mxu0 0.0
  %376 = vmatpush.msra.mxu0 0.0
  %377 = vmatpush.msra.mxu0 0.0
  %378 = vmatpush.msra.mxu0 0.0
  %379 = vmatpush.msra.mxu0 0.0
  %380 = vmatpush.msra.mxu0 0.0
  %381 = vmatpush.msra.mxu0 %v291
  %382 = vmatpush.msra.mxu0 %v290
  %383 = vmatpush.msra.mxu0 %v289
  %384 = vmatpush.msra.mxu0 %v288
  %385 = vmatpush.msra.mxu0 %v287
  %386 = vmatpush.msra.mxu0 %v286
  %387 = vmatpush.msra.mxu0 %v285
  %388 = vmatpush.msra.mxu0 %v284
  %389 = vmatmul.f32.gmra.mxu0 %v350
  %v390 = vpop.f32.mrf.mxu0
  %v391 = vadd.f32 %v311, %v390
  %392 = vmatmul.f32.gmra.mxu0 %v353
  %v393 = vpop.f32.mrf.mxu0
  %v394 = vadd.f32 %v316, %v393
  %395 = vmatmul.f32.gmra.mxu0 %v356
  %v396 = vpop.f32.mrf.mxu0
  %v397 = vadd.f32 %v321, %v396
  %398 = vmatmul.f32.gmra.mxu0 %v359
  %v399 = vpop.f32.mrf.mxu0
  %v400 = vadd.f32 %v326, %v399
  %401 = vmatmul.f32.gmra.mxu0 %v362
  %v402 = vpop.f32.mrf.mxu0
  %v403 = vadd.f32 %v331, %v402
  %404 = vmatmul.f32.gmra.mxu0 %v365
  %v405 = vpop.f32.mrf.mxu0
  %v406 = vadd.f32 %v336, %v405
  %407 = vmatmul.f32.gmra.mxu0 %v368
  %v408 = vpop.f32.mrf.mxu0
  %v409 = vadd.f32 %v341, %v408
  %410 = vmatmul.f32.gmra.mxu0 %v371
  %v411 = vpop.f32.mrf.mxu0
  %v412 = vadd.f32 %v346, %v411
  %413 = vdwg.mxu0
  %v414 = vmax.f32 %v391, 0.0
  %v415 = vmax.f32 %v394, 0.0
  %v416 = vmax.f32 %v397, 0.0
  %v417 = vmax.f32 %v400, 0.0
  %v418 = vmax.f32 %v403, 0.0
  %v419 = vmax.f32 %v406, 0.0
  %v420 = vmax.f32 %v409, 0.0
  %v421 = vmax.f32 %v412, 0.0
  %v422 = vld [vmem:[%s8] sm:$0xff]
  %v423 = vld [vmem:[%s8 + $0x8] sm:$0xff]
  %v424 = vld [vmem:[%s8 + $0x10] sm:$0xff]
  %v425 = vld [vmem:[%s8 + $0x18] sm:$0xff]
  %v426 = vld [vmem:[%s9] sm:$0xff]
  %v427 = vld [vmem:[%s9 + $0x8] sm:$0xff]
  %v428 = vld [vmem:[%s9 + $0x10] sm:$0xff]
  %v429 = vld [vmem:[%s9 + $0x18] sm:$0xff]
  %431 = vset.pattern.permute.xlu0 0
  %432 = vperm.xlu0 %431, %v426
  %v433 = vpop.permute.xlu0 %432
  %436 = vset.pattern.permute.xlu0 0
  %437 = vperm.xlu0 %436, %v427
  %v438 = vpop.permute.xlu0 %437
  %441 = vset.pattern.permute.xlu0 0
  %442 = vperm.xlu0 %441, %v428
  %v443 = vpop.permute.xlu0 %442
  %446 = vset.pattern.permute.xlu0 0
  %447 = vperm.xlu0 %446, %v429
  %v448 = vpop.permute.xlu0 %447
  %v451 = vsel %vm348, %v422, 0
  %v454 = vsel %vm348, %v423, 0
  %v457 = vsel %vm348, %v424, 0
  %v460 = vsel %vm348, %v425, 0
  %462 = vmatpush.msra.mxu0 0.0
  %463 = vmatpush.msra.mxu0 0.0
  %464 = vmatpush.msra.mxu0 0.0
  %465 = vmatpush.msra.mxu0 0.0
  %466 = vmatpush.msra.mxu0 0.0
  %467 = vmatpush.msra.mxu0 0.0
  %468 = vmatpush.msra.mxu0 0.0
  %469 = vmatpush.msra.mxu0 0.0
  %470 = vmatpush.msra.mxu0 %v421
  %471 = vmatpush.msra.mxu0 %v420
  %472 = vmatpush.msra.mxu0 %v419
  %473 = vmatpush.msra.mxu0 %v418
  %474 = vmatpush.msra.mxu0 %v417
  %475 = vmatpush.msra.mxu0 %v416
  %476 = vmatpush.msra.mxu0 %v415
  %477 = vmatpush.msra.mxu0 %v414
  %478 = vmatmul.f32.gmra.mxu0 %v451
  %v479 = vpop.f32.mrf.mxu0
  %v480 = vadd.f32 %v433, %v479
  %481 = vmatmul.f32.gmra.mxu0 %v454
  %v482 = vpop.f32.mrf.mxu0
  %v483 = vadd.f32 %v438, %v482
  %484 = vmatmul.f32.gmra.mxu0 %v457
  %v485 = vpop.f32.mrf.mxu0
  %v486 = vadd.f32 %v443, %v485
  %487 = vmatmul.f32.gmra.mxu0 %v460
  %v488 = vpop.f32.mrf.mxu0
  %v489 = vadd.f32 %v448, %v488
  %490 = vdwg.mxu0
  %v491 = vsub.f32 %v480, %v486
  %v492 = vsub.f32 %v483, %v489
  %v493 = vmul.f32 %v491, %v491
  %v494 = vmul.f32 %v492, %v492
  %v495 = vadd.f32 %v493, %v494
  %v496 = vrot.slane %v495, 4
  %v497 = vadd.f32 %v495, %v496
  %v498 = vrot.slane %v497, 2
  %v499 = vadd.f32 %v497, %v498
  %v500 = vrot.slane %v499, 1
  %v501 = vadd.f32 %v499, %v500
  %v502 = vrsqrt.pop %v501
  %v503 = vmul.f32 %v502, %v501
  %v504 = vmul.f32 %v503, %v502
  %v505 = vmul.f32 0.5, %v504
  %v506 = vsub.f32 1.5, %v505
  %v507 = vmul.f32 %v502, %v506
  %v508 = vmul.f32 %v501, %v507
  %vm509 = vcmp.eq.f32.partialorder %v501, inf
  %v510 = vsel %vm509, %v501, %v508
  %vm511 = vcmp.eq.f32.partialorder %v501, 0.0
  %v512 = vand.u32 %v501, 2147483648
  %v513 = vsel %vm511, %v512, %v510
  %v514 = vsub.f32 1.0, %v75
  %v515 = vmul.f32 %v514, %v513
  %516 = vst [vmem:[%s10] sm:$0x1] %v515
  // Predicated region
  $region42: #{_rnd_forward_impl.1} parent=0 // pred_check
    _
  $region43: #{_rnd_forward_impl.1} parent=0 // pred_check_branch
    %518 = sbr.rel (0) target = $region45
  $region44: #{_rnd_forward_impl.1} parent=0 // pred_region
    _
  $region45: #{_rnd_forward_impl.1} parent=0 // pred_fallthru
    _
  // Predicated region
  $region46: #{_rnd_forward_impl.1} parent=0 // pred_check
    _
  $region47: #{_rnd_forward_impl.1} parent=0 // pred_check_branch
    %520 = sbr.rel (0) target = $region49
  $region48: #{_rnd_forward_impl.1} parent=0 // pred_region
    _
  $region49: #{_rnd_forward_impl.1} parent=0 // pred_fallthru
    _

</llo_original>
